<compile_context>
chip_gen: v5e
topology: v5e:2x2
jax: 0.10.0
libtpu: 0.0.40
codegen_flags: <defaults>
</compile_context>

<pallas_src>
import numpy as np

import jax
import jax.numpy as jnp
from jax.experimental import pallas as pl
from jax.experimental.pallas import tpu as pltpu

_EPS = 1e-5


# --------------------------------------------------------------------------------------
# Static structural matrices (built with numpy at trace time; become constants under jit)
# --------------------------------------------------------------------------------------

def _choose_pack(H, W, C):
    """Smallest divisor P of H that makes the lane dim P*W*C a multiple of 128 (else 1)."""
    for p in range(1, H + 1):
        if H % p == 0 and (p * W * C) % 128 == 0:
            return p
    return 1


def _row_shift_mats(N, HB):
    """(2, N*HB, N*HB): carries -1 and +1.  sh[i] @ x shifts slab rows by c with zero fill
    at per-image H borders (the carry-0 copy is the identity and is skipped in-kernel)."""
    NR = N * HB
    sh = np.zeros((2, NR, NR), np.float32)
    for idx, c in enumerate((-1, 1)):
        for r in range(NR):
            yb = r % HB
            if 0 <= yb + c < HB:
                sh[idx, r, r + c] = 1.0
    return sh


def _tap_indicators(W, P):
    """Indicator tensor (3, 3, 3, P*W, P*W): [carry+1, dy, dx, yp'*W+xx, yp*W+x].

    Encodes, for every 3x3 tap (dy, dx) and packed sub-row yp, which lane block of the
    (row-shifted) input feeds which lane block of the output, including the W zero-border."""
    PW = P * W
    ind = np.zeros((3, 3, 3, PW, PW), np.float32)
    for dy in range(3):
        for yp in range(P):
            s = yp + dy - 1
            carry, ypp = s // P, s % P          # which row-shift copy / packed sub-row it lands in
            for dx in range(3):
                for x in range(W):
                    xx = x + dx - 1
                    if 0 <= xx < W:             # W 'same' zero padding
                        ind[carry + 1, dy, dx, ypp * W + xx, yp * W + x] = 1.0
    return ind


# --------------------------------------------------------------------------------------
# Kernel
# --------------------------------------------------------------------------------------

def _resblock_kernel(x_ref, sh_ref, bands_ref, rows_ref, a_ref, out_ref):
    """Whole ResidualBlock on a lane-dense (N*H/P, P*W*C) slab; all contractions on the MXU.

    bands_ref : (7, L, L) = [m1[c=-1], m1[c=0], m1[c=+1], m2[c=-1], m2[c=0], m2[c=+1],
                             bn channel-selector * 1/(N*H*W)]
    rows_ref  : (6, L)    = [b1, g1, be1, b2, g2, be2] pre-tiled across the lane axis
    sh_ref    : (2, NR, NR) row-shift matrices for carries -1 / +1
    a_ref     : (1,) SMEM  PReLU slope (single shared parameter)
    """
    x2d = x_ref[...]                              # (NR, L), L multiple of 128
    rows = rows_ref[...]                          # (6, L)
    b1, g1, be1 = rows[0:1], rows[1:2], rows[2:3]
    b2, g2, be2 = rows[3:4], rows[4:5], rows[5:6]
    sel = bands_ref[6]                            # (L, L) same-channel selector (pre-scaled)
    a = a_ref[0]                                  # PReLU slope

    def conv(src, base, bias_row):
        # 3x3 'same' conv == 2 row-shift matmuls + 3 banded (L, L) tap matmuls (all MXU).
        # carry 0: the row-shift is the identity -> multiply src directly by the band matrix.
        acc = bias_row + jnp.dot(src, bands_ref[base + 1],
                                 preferred_element_type=jnp.float32)
        for s_idx, b_off in ((0, 0), (1, 2)):     # carry -1 then +1, static unroll
            shifted = jnp.dot(sh_ref[s_idx], src,
                              preferred_element_type=jnp.float32)   # row shift + H zero-border
            acc = acc + jnp.dot(shifted, bands_ref[base + b_off],
                                preferred_element_type=jnp.float32)
        return acc

    def bn(y, gamma_row, beta_row):
        # Single-pass batch stats: var = E[x^2] - mean^2.  One selector matmul for both
        # reductions (1/count already folded into `sel`), gamma folded into one scale.
        stats = jnp.concatenate(
            [jnp.sum(y, axis=0, keepdims=True),          # (1, L) sublane reduce (XLU)
             jnp.sum(y * y, axis=0, keepdims=True)],     # (1, L)
            axis=0)                                      # (2, L)
        red = jnp.dot(stats, sel, preferred_element_type=jnp.float32)   # (2, L) on MXU
        mean_row, ex2_row = red[0:1], red[1:2]
        var_row = ex2_row - mean_row * mean_row
        scale_row = gamma_row * jax.lax.rsqrt(var_row + _EPS)           # rsqrt -> EUP
        shift_row = beta_row - mean_row * scale_row
        return y * scale_row + shift_row

    # conv1 -> bn1 -> PReLU
    y = bn(conv(x2d, 0, b1), g1, be1)
    y = jnp.where(y > 0, y, a * y)
    # conv2 -> bn2 -> residual add
    z = bn(conv(y, 3, b2), g2, be2)
    out_ref[...] = z + x2d                        # full-width (128-lane) store


# --------------------------------------------------------------------------------------
# Wrapper
# --------------------------------------------------------------------------------------

@jax.jit
def residual_block(x_nchw, params):
    N, C, H, W = x_nchw.shape
    P = _choose_pack(H, W, C)
    HB = H // P
    NR, L = N * HB, P * W * C

    # Free layout plumbing: NCHW -> NHWC -> lane-dense (N*H/P, P*W*C) slab.
    x = jnp.transpose(x_nchw, (0, 2, 3, 1)).astype(jnp.float32)
    x2d = x.reshape(N, HB, P, W, C).reshape(NR, L)

    # Static structural matrices.
    sh = jnp.asarray(_row_shift_mats(N, HB))                       # (2, NR, NR)
    ind = jnp.asarray(_tap_indicators(W, P))                       # (3, 3, 3, P*W, P*W)
    lane_ch = np.arange(L) % C
    bsel = (lane_ch[:, None] == lane_ch[None, :]).astype(np.float32) / float(N * H * W)

    # Banded conv weights: one (L, L) matrix per row-shift carry, encoding the dx taps,
    # the channel contraction and the W zero-border.  (Glue einsum, runs in XLA.)
    m1 = jnp.einsum("kdeab,deio->kaibo", ind, params["w1"]).reshape(3, L, L)
    m2 = jnp.einsum("kdeab,deio->kaibo", ind, params["w2"]).reshape(3, L, L)
    bands = jnp.concatenate([m1, m2, jnp.asarray(bsel)[None]], axis=0)   # (7, L, L)

    # Per-channel params pre-tiled across the lane axis, packed into one (6, L) array.
    def tile_row(p):
        return jnp.tile(p.astype(jnp.float32).reshape(1, C), (1, P * W))   # (1, C) -> (1, L)

    rows = jnp.concatenate(
        [tile_row(params[k]) for k in ("b1", "g1", "be1", "b2", "g2", "be2")], axis=0)  # (6, L)

    vmem = pl.BlockSpec(memory_space=pltpu.MemorySpace.VMEM)
    smem = pl.BlockSpec(memory_space=pltpu.MemorySpace.SMEM)

    # Grid-less single invocation: BatchNorm needs global (N,H,W) statistics, so the whole
    # (small) activation stays resident in VMEM.
    # TODO(synk): for large N*H*W (esp. v7x's 64 MiB VMEM / 2 TensorCores) tile over H with a
    # 1-row halo and a cross-tile reduction for the BN statistics.
    out2d = pl.pallas_call(
        _resblock_kernel,
        out_shape=jax.ShapeDtypeStruct((NR, L), jnp.float32),
        in_specs=[vmem, vmem, vmem, vmem, smem],
        out_specs=vmem,
    )(x2d, sh, bands, rows, params["a"])

    out = out2d.reshape(N, HB, P, W, C).reshape(N, H, W, C)
    return jnp.transpose(out, (0, 3, 1, 2))                        # NHWC -> NCHW


# --------------------------------------------------------------------------------------
# Parameters & pure-JAX reference
# --------------------------------------------------------------------------------------

def init_params(key, C):
    """Deterministic synthetic parameters (shapes from ResidualBlock.__init__)."""
    ks = jax.random.split(key, 8)
    return {
        # conv weights stored HWIO (3, 3, C_in, C_out)
        "w1": jax.random.normal(ks[0], (3, 3, C, C), jnp.float32) * 0.1,
        "b1": jax.random.normal(ks[1], (1, C), jnp.float32) * 0.05,
        "g1": 1.0 + jax.random.normal(ks[2], (1, C), jnp.float32) * 0.05,
        "be1": jax.random.normal(ks[3], (1, C), jnp.float32) * 0.05,
        "w2": jax.random.normal(ks[4], (3, 3, C, C), jnp.float32) * 0.1,
        "b2": jax.random.normal(ks[5], (1, C), jnp.float32) * 0.05,
        "g2": 1.0 + jax.random.normal(ks[6], (1, C), jnp.float32) * 0.05,
        "be2": jax.random.normal(ks[7], (1, C), jnp.float32) * 0.05,
        "a": jnp.full((1,), 0.25, jnp.float32),      # nn.PReLU() default init
    }


def reference(x_nchw, params):
    """Pure-JAX reference with identical semantics (for correctness check)."""
    x = jnp.transpose(x_nchw, (0, 2, 3, 1)).astype(jnp.float32)

    def conv(inp, w, b):
        y = jax.lax.conv_general_dilated(
            inp, w, window_strides=(1, 1), padding="SAME",
            dimension_numbers=("NHWC", "HWIO", "NHWC"))
        return y + b.reshape(1, 1, 1, -1)

    def bn(inp, g, be):
        m = jnp.mean(inp, axis=(0, 1, 2), keepdims=True)
        v = jnp.mean((inp - m) ** 2, axis=(0, 1, 2), keepdims=True)
        return (inp - m) / jnp.sqrt(v + _EPS) * g.reshape(1, 1, 1, -1) + be.reshape(1, 1, 1, -1)

    a = params["a"][0]
    out = bn(conv(x, params["w1"], params["b1"]), params["g1"], params["be1"])
    out = jnp.where(out > 0, out, a * out)
    out = bn(conv(out, params["w2"], params["b2"]), params["g2"], params["be2"])
    out = out + x
    return jnp.transpose(out, (0, 3, 1, 2))


if __name__ == "__main__":
    key = jax.random.PRNGKey(0)
    kx, kp = jax.random.split(key)

    N, C, H, W = 2, 4, 16, 16                       # small NCHW input
    x = jax.random.normal(kx, (N, C, H, W), jnp.float32)
    params = init_params(kp, C)

    out = residual_block(x, params)
    out = jax.block_until_ready(out)

    ref = reference(x, params)
    assert out.shape == (N, C, H, W)
    max_err = float(jnp.max(jnp.abs(out - ref)))
    if max_err > 1e-4:
        raise SystemExit(f"mismatch vs reference: max abs err = {max_err:g}")

    print("KERNEL_OK")
</pallas_src>

<mosaic_0001>
module attributes {stable_mosaic.version = 11 : i64} {
  func.func @_resblock_kernel(%arg0: memref<16x128xf32, #tpu.memory_space<vmem>>, %arg1: memref<2x16x16xf32, #tpu.memory_space<vmem>>, %arg2: memref<7x128x128xf32, #tpu.memory_space<vmem>>, %arg3: memref<6x128xf32, #tpu.memory_space<vmem>>, %arg4: memref<1xf32, #tpu.memory_space<smem>>, %arg5: memref<16x128xf32, #tpu.memory_space<vmem>>) attributes {dimension_semantics = [], scalar_prefetch = 0 : i64, scratch_operands = 0 : i64, tpu.core_type = #tpu.core_type<tc>} {
    %c0 = arith.constant 0 : index
    %c0_0 = arith.constant 0 : index
    %0 = vector.load %arg0[%c0, %c0_0] : memref<16x128xf32, #tpu.memory_space<vmem>>, vector<16x128xf32>
    %c0_1 = arith.constant 0 : index
    %c0_2 = arith.constant 0 : index
    %1 = vector.load %arg3[%c0_1, %c0_2] : memref<6x128xf32, #tpu.memory_space<vmem>>, vector<6x128xf32>
    %2 = vector.extract_strided_slice %1 {offsets = [0, 0], sizes = [1, 128], strides = [1, 1]} : vector<6x128xf32> to vector<1x128xf32>
    %3 = vector.extract_strided_slice %1 {offsets = [1, 0], sizes = [1, 128], strides = [1, 1]} : vector<6x128xf32> to vector<1x128xf32>
    %4 = vector.extract_strided_slice %1 {offsets = [2, 0], sizes = [1, 128], strides = [1, 1]} : vector<6x128xf32> to vector<1x128xf32>
    %5 = vector.extract_strided_slice %1 {offsets = [3, 0], sizes = [1, 128], strides = [1, 1]} : vector<6x128xf32> to vector<1x128xf32>
    %6 = vector.extract_strided_slice %1 {offsets = [4, 0], sizes = [1, 128], strides = [1, 1]} : vector<6x128xf32> to vector<1x128xf32>
    %7 = vector.extract_strided_slice %1 {offsets = [5, 0], sizes = [1, 128], strides = [1, 1]} : vector<6x128xf32> to vector<1x128xf32>
    %c6 = arith.constant 6 : index
    %c0_3 = arith.constant 0 : index
    %c0_4 = arith.constant 0 : index
    %8 = vector.load %arg2[%c6, %c0_3, %c0_4] : memref<7x128x128xf32, #tpu.memory_space<vmem>>, vector<1x128x128xf32>
    %9 = vector.shape_cast %8 : vector<1x128x128xf32> to vector<128x128xf32>
    %c0_5 = arith.constant 0 : index
    %10 = memref.load %arg4[%c0_5] : memref<1xf32, #tpu.memory_space<smem>>
    %c1 = arith.constant 1 : index
    %c0_6 = arith.constant 0 : index
    %c0_7 = arith.constant 0 : index
    %11 = vector.load %arg2[%c1, %c0_6, %c0_7] : memref<7x128x128xf32, #tpu.memory_space<vmem>>, vector<1x128x128xf32>
    %12 = vector.shape_cast %11 : vector<1x128x128xf32> to vector<128x128xf32>
    %cst = arith.constant dense<0.000000e+00> : vector<16x128xf32>
    %13 = tpu.matmul %0, %12, %cst {dimension_numbers = #tpu.dot_dimension_numbers<[1], [0], [0], [1], [0, 0, 1, 1], [], []>} : vector<16x128xf32>, vector<128x128xf32>, vector<16x128xf32> -> vector<16x128xf32>
    %14 = vector.broadcast %2 : vector<1x128xf32> to vector<16x128xf32>
    %15 = arith.addf %14, %13 : vector<16x128xf32>
    %c0_8 = arith.constant 0 : index
    %c0_9 = arith.constant 0 : index
    %c0_10 = arith.constant 0 : index
    %16 = vector.load %arg1[%c0_8, %c0_9, %c0_10] : memref<2x16x16xf32, #tpu.memory_space<vmem>>, vector<1x16x16xf32>
    %17 = vector.shape_cast %16 : vector<1x16x16xf32> to vector<16x16xf32>
    %cst_11 = arith.constant dense<0.000000e+00> : vector<16x128xf32>
    %18 = tpu.matmul %17, %0, %cst_11 {dimension_numbers = #tpu.dot_dimension_numbers<[1], [0], [0], [1], [0, 0, 1, 1], [], []>} : vector<16x16xf32>, vector<16x128xf32>, vector<16x128xf32> -> vector<16x128xf32>
    %c0_12 = arith.constant 0 : index
    %c0_13 = arith.constant 0 : index
    %c0_14 = arith.constant 0 : index
    %19 = vector.load %arg2[%c0_12, %c0_13, %c0_14] : memref<7x128x128xf32, #tpu.memory_space<vmem>>, vector<1x128x128xf32>
    %20 = vector.shape_cast %19 : vector<1x128x128xf32> to vector<128x128xf32>
    %cst_15 = arith.constant dense<0.000000e+00> : vector<16x128xf32>
    %21 = tpu.matmul %18, %20, %cst_15 {dimension_numbers = #tpu.dot_dimension_numbers<[1], [0], [0], [1], [0, 0, 1, 1], [], []>} : vector<16x128xf32>, vector<128x128xf32>, vector<16x128xf32> -> vector<16x128xf32>
    %22 = arith.addf %15, %21 : vector<16x128xf32>
    %c1_16 = arith.constant 1 : index
    %c0_17 = arith.constant 0 : index
    %c0_18 = arith.constant 0 : index
    %23 = vector.load %arg1[%c1_16, %c0_17, %c0_18] : memref<2x16x16xf32, #tpu.memory_space<vmem>>, vector<1x16x16xf32>
    %24 = vector.shape_cast %23 : vector<1x16x16xf32> to vector<16x16xf32>
    %cst_19 = arith.constant dense<0.000000e+00> : vector<16x128xf32>
    %25 = tpu.matmul %24, %0, %cst_19 {dimension_numbers = #tpu.dot_dimension_numbers<[1], [0], [0], [1], [0, 0, 1, 1], [], []>} : vector<16x16xf32>, vector<16x128xf32>, vector<16x128xf32> -> vector<16x128xf32>
    %c2 = arith.constant 2 : index
    %c0_20 = arith.constant 0 : index
    %c0_21 = arith.constant 0 : index
    %26 = vector.load %arg2[%c2, %c0_20, %c0_21] : memref<7x128x128xf32, #tpu.memory_space<vmem>>, vector<1x128x128xf32>
    %27 = vector.shape_cast %26 : vector<1x128x128xf32> to vector<128x128xf32>
    %cst_22 = arith.constant dense<0.000000e+00> : vector<16x128xf32>
    %28 = tpu.matmul %25, %27, %cst_22 {dimension_numbers = #tpu.dot_dimension_numbers<[1], [0], [0], [1], [0, 0, 1, 1], [], []>} : vector<16x128xf32>, vector<128x128xf32>, vector<16x128xf32> -> vector<16x128xf32>
    %29 = arith.addf %22, %28 : vector<16x128xf32>
    %cst_23 = arith.constant dense<0.000000e+00> : vector<128xf32>
    %30 = vector.multi_reduction <add>, %29, %cst_23 [0] : vector<16x128xf32> to vector<128xf32>
    %31 = vector.shape_cast %30 : vector<128xf32> to vector<1x128xf32>
    %32 = arith.mulf %29, %29 : vector<16x128xf32>
    %cst_24 = arith.constant dense<0.000000e+00> : vector<128xf32>
    %33 = vector.multi_reduction <add>, %32, %cst_24 [0] : vector<16x128xf32> to vector<128xf32>
    %34 = vector.shape_cast %33 : vector<128xf32> to vector<1x128xf32>
    %35 = tpu.concatenate %31, %34 in 0 : vector<1x128xf32>, vector<1x128xf32> -> vector<2x128xf32>
    %cst_25 = arith.constant dense<0.000000e+00> : vector<2x128xf32>
    %36 = tpu.matmul %35, %9, %cst_25 {dimension_numbers = #tpu.dot_dimension_numbers<[1], [0], [0], [1], [0, 0, 1, 1], [], []>} : vector<2x128xf32>, vector<128x128xf32>, vector<2x128xf32> -> vector<2x128xf32>
    %37 = vector.extract_strided_slice %36 {offsets = [0, 0], sizes = [1, 128], strides = [1, 1]} : vector<2x128xf32> to vector<1x128xf32>
    %38 = vector.extract_strided_slice %36 {offsets = [1, 0], sizes = [1, 128], strides = [1, 1]} : vector<2x128xf32> to vector<1x128xf32>
    %39 = arith.mulf %37, %37 : vector<1x128xf32>
    %40 = arith.subf %38, %39 : vector<1x128xf32>
    %cst_26 = arith.constant 9.99999974E-6 : f32
    %41 = vector.broadcast %cst_26 : f32 to vector<1x128xf32>
    %42 = arith.addf %40, %41 : vector<1x128xf32>
    %43 = math.rsqrt %42 : vector<1x128xf32>
    %44 = arith.mulf %3, %43 : vector<1x128xf32>
    %45 = arith.mulf %37, %44 : vector<1x128xf32>
    %46 = arith.subf %4, %45 : vector<1x128xf32>
    %47 = vector.broadcast %44 : vector<1x128xf32> to vector<16x128xf32>
    %48 = arith.mulf %29, %47 : vector<16x128xf32>
    %49 = vector.broadcast %46 : vector<1x128xf32> to vector<16x128xf32>
    %50 = arith.addf %48, %49 : vector<16x128xf32>
    %cst_27 = arith.constant 0.000000e+00 : f32
    %51 = vector.broadcast %cst_27 : f32 to vector<16x128xf32>
    %52 = arith.cmpf ogt, %50, %51 : vector<16x128xf32>
    %53 = vector.broadcast %10 : f32 to vector<16x128xf32>
    %54 = arith.mulf %53, %50 : vector<16x128xf32>
    %55 = arith.select %52, %50, %54 : vector<16x128xi1>, vector<16x128xf32>
    %c4 = arith.constant 4 : index
    %c0_28 = arith.constant 0 : index
    %c0_29 = arith.constant 0 : index
    %56 = vector.load %arg2[%c4, %c0_28, %c0_29] : memref<7x128x128xf32, #tpu.memory_space<vmem>>, vector<1x128x128xf32>
    %57 = vector.shape_cast %56 : vector<1x128x128xf32> to vector<128x128xf32>
    %cst_30 = arith.constant dense<0.000000e+00> : vector<16x128xf32>
    %58 = tpu.matmul %55, %57, %cst_30 {dimension_numbers = #tpu.dot_dimension_numbers<[1], [0], [0], [1], [0, 0, 1, 1], [], []>} : vector<16x128xf32>, vector<128x128xf32>, vector<16x128xf32> -> vector<16x128xf32>
    %59 = vector.broadcast %5 : vector<1x128xf32> to vector<16x128xf32>
    %60 = arith.addf %59, %58 : vector<16x128xf32>
    %c0_31 = arith.constant 0 : index
    %c0_32 = arith.constant 0 : index
    %c0_33 = arith.constant 0 : index
    %61 = vector.load %arg1[%c0_31, %c0_32, %c0_33] : memref<2x16x16xf32, #tpu.memory_space<vmem>>, vector<1x16x16xf32>
    %62 = vector.shape_cast %61 : vector<1x16x16xf32> to vector<16x16xf32>
    %cst_34 = arith.constant dense<0.000000e+00> : vector<16x128xf32>
    %63 = tpu.matmul %62, %55, %cst_34 {dimension_numbers = #tpu.dot_dimension_numbers<[1], [0], [0], [1], [0, 0, 1, 1], [], []>} : vector<16x16xf32>, vector<16x128xf32>, vector<16x128xf32> -> vector<16x128xf32>
    %c3 = arith.constant 3 : index
    %c0_35 = arith.constant 0 : index
    %c0_36 = arith.constant 0 : index
    %64 = vector.load %arg2[%c3, %c0_35, %c0_36] : memref<7x128x128xf32, #tpu.memory_space<vmem>>, vector<1x128x128xf32>
    %65 = vector.shape_cast %64 : vector<1x128x128xf32> to vector<128x128xf32>
    %cst_37 = arith.constant dense<0.000000e+00> : vector<16x128xf32>
    %66 = tpu.matmul %63, %65, %cst_37 {dimension_numbers = #tpu.dot_dimension_numbers<[1], [0], [0], [1], [0, 0, 1, 1], [], []>} : vector<16x128xf32>, vector<128x128xf32>, vector<16x128xf32> -> vector<16x128xf32>
    %67 = arith.addf %60, %66 : vector<16x128xf32>
    %c1_38 = arith.constant 1 : index
    %c0_39 = arith.constant 0 : index
    %c0_40 = arith.constant 0 : index
    %68 = vector.load %arg1[%c1_38, %c0_39, %c0_40] : memref<2x16x16xf32, #tpu.memory_space<vmem>>, vector<1x16x16xf32>
    %69 = vector.shape_cast %68 : vector<1x16x16xf32> to vector<16x16xf32>
    %cst_41 = arith.constant dense<0.000000e+00> : vector<16x128xf32>
    %70 = tpu.matmul %69, %55, %cst_41 {dimension_numbers = #tpu.dot_dimension_numbers<[1], [0], [0], [1], [0, 0, 1, 1], [], []>} : vector<16x16xf32>, vector<16x128xf32>, vector<16x128xf32> -> vector<16x128xf32>
    %c5 = arith.constant 5 : index
    %c0_42 = arith.constant 0 : index
    %c0_43 = arith.constant 0 : index
    %71 = vector.load %arg2[%c5, %c0_42, %c0_43] : memref<7x128x128xf32, #tpu.memory_space<vmem>>, vector<1x128x128xf32>
    %72 = vector.shape_cast %71 : vector<1x128x128xf32> to vector<128x128xf32>
    %cst_44 = arith.constant dense<0.000000e+00> : vector<16x128xf32>
    %73 = tpu.matmul %70, %72, %cst_44 {dimension_numbers = #tpu.dot_dimension_numbers<[1], [0], [0], [1], [0, 0, 1, 1], [], []>} : vector<16x128xf32>, vector<128x128xf32>, vector<16x128xf32> -> vector<16x128xf32>
    %74 = arith.addf %67, %73 : vector<16x128xf32>
    %cst_45 = arith.constant dense<0.000000e+00> : vector<128xf32>
    %75 = vector.multi_reduction <add>, %74, %cst_45 [0] : vector<16x128xf32> to vector<128xf32>
    %76 = vector.shape_cast %75 : vector<128xf32> to vector<1x128xf32>
    %77 = arith.mulf %74, %74 : vector<16x128xf32>
    %cst_46 = arith.constant dense<0.000000e+00> : vector<128xf32>
    %78 = vector.multi_reduction <add>, %77, %cst_46 [0] : vector<16x128xf32> to vector<128xf32>
    %79 = vector.shape_cast %78 : vector<128xf32> to vector<1x128xf32>
    %80 = tpu.concatenate %76, %79 in 0 : vector<1x128xf32>, vector<1x128xf32> -> vector<2x128xf32>
    %cst_47 = arith.constant dense<0.000000e+00> : vector<2x128xf32>
    %81 = tpu.matmul %80, %9, %cst_47 {dimension_numbers = #tpu.dot_dimension_numbers<[1], [0], [0], [1], [0, 0, 1, 1], [], []>} : vector<2x128xf32>, vector<128x128xf32>, vector<2x128xf32> -> vector<2x128xf32>
    %82 = vector.extract_strided_slice %81 {offsets = [0, 0], sizes = [1, 128], strides = [1, 1]} : vector<2x128xf32> to vector<1x128xf32>
    %83 = vector.extract_strided_slice %81 {offsets = [1, 0], sizes = [1, 128], strides = [1, 1]} : vector<2x128xf32> to vector<1x128xf32>
    %84 = arith.mulf %82, %82 : vector<1x128xf32>
    %85 = arith.subf %83, %84 : vector<1x128xf32>
    %cst_48 = arith.constant 9.99999974E-6 : f32
    %86 = vector.broadcast %cst_48 : f32 to vector<1x128xf32>
    %87 = arith.addf %85, %86 : vector<1x128xf32>
    %88 = math.rsqrt %87 : vector<1x128xf32>
    %89 = arith.mulf %6, %88 : vector<1x128xf32>
    %90 = arith.mulf %82, %89 : vector<1x128xf32>
    %91 = arith.subf %7, %90 : vector<1x128xf32>
    %92 = vector.broadcast %89 : vector<1x128xf32> to vector<16x128xf32>
    %93 = arith.mulf %74, %92 : vector<16x128xf32>
    %94 = vector.broadcast %91 : vector<1x128xf32> to vector<16x128xf32>
    %95 = arith.addf %93, %94 : vector<16x128xf32>
    %96 = arith.addf %95, %0 : vector<16x128xf32>
    %c0_49 = arith.constant 0 : index
    %c0_50 = arith.constant 0 : index
    %97 = vector.load %arg5[%c0_49, %c0_50] : memref<16x128xf32, #tpu.memory_space<vmem>>, vector<16x128xf32>
    tpu.vector_store %arg5[%c0_49, %c0_50], %96 {strides = array<i32>} : memref<16x128xf32, #tpu.memory_space<vmem>>, vector<16x128xf32>,
    return
  }
}

</mosaic_0001>

<llo_original>
// kernel: residual_block.1
$region0: #{residual_block.1}
  #allocation0 [shape = 'u32[]', space=smem, size = 0x4, offset = 0x4, fixed_abs, tag = 'smem constant byte address 0x4 - core index']
  #allocation1 [shape = 'u32[72,128]{1,0:T(1,128)}', space=vmem, size = 0x9000, scoped, tag = 'internal scratch']
  #allocation2 [shape = 'f32[1]{0:T(128)S(6)}', space=smem, size = 0x200, scoped, tag = 'scoped memory for residual_block.1']
  %s0 = inlined_call_operand.vmem [shape: f32[16,128], index: 0, kind: input, shape index: {}]
  %s1 = inlined_call_operand.vmem [shape: f32[2,16,16], index: 1, kind: input, shape index: {}]
  %s2 = inlined_call_operand.vmem [shape: f32[7,128,128], index: 2, kind: input, shape index: {}]
  %s3 = inlined_call_operand.vmem [shape: f32[6,128], index: 3, kind: input, shape index: {}]
  %s4 = inlined_call_operand.<no memory space> [shape: f32[1], index: 4, kind: input, shape index: {}]
  %s5 = inlined_call_operand.vmem [shape: f32[16,128], index: 5, kind: output, shape index: {}]
  %s6 = sld [smem:[#allocation0]]
  $region30: #{residual_block.1} parent=0
    _
  %s8 = ssub.s32 1, %s6
  %s9 = scalar_select 0, %s8, %s6
  %10 = sst [smem:[#allocation2]] %s4
  // Predicated region
  $region2: #{residual_block.1} parent=0 // pred_check
    _
  $region3: #{residual_block.1} parent=0 // pred_check_branch
    %12 = sbr.rel (0) target = $region5
  $region4: #{residual_block.1} parent=0 // pred_region
    _
  $region5: #{residual_block.1} parent=0 // pred_fallthru
    _
  // Predicated region
  $region6: #{residual_block.1} parent=0 // pred_check
    _
  $region7: #{residual_block.1} parent=0 // pred_check_branch
    %14 = sbr.rel (0) target = $region9
  $region8: #{residual_block.1} parent=0 // pred_region
    _
  $region9: #{residual_block.1} parent=0 // pred_fallthru
    _
  // Predicated region
  $region10: #{residual_block.1} parent=0 // pred_check
    _
  $region11: #{residual_block.1} parent=0 // pred_check_branch
    %16 = sbr.rel (0) target = $region13
  $region12: #{residual_block.1} parent=0 // pred_region
    _
  $region13: #{residual_block.1} parent=0 // pred_fallthru
    _
  // Predicated region
  $region14: #{residual_block.1} parent=0 // pred_check
    _
  $region15: #{residual_block.1} parent=0 // pred_check_branch
    %18 = sbr.rel (0) target = $region17
  $region16: #{residual_block.1} parent=0 // pred_region
    _
  $region17: #{residual_block.1} parent=0 // pred_fallthru
    _
  // Predicated region
  $region18: #{residual_block.1} parent=0 // pred_check
    _
  $region19: #{residual_block.1} parent=0 // pred_check_branch
    %20 = sbr.rel (0) target = $region21
  $region20: #{residual_block.1} parent=0 // pred_region
    _
  $region21: #{residual_block.1} parent=0 // pred_fallthru
    _
  %v21 = vld [vmem:[%s0] sm:$0xff]
  %v22 = vld [vmem:[%s0 + $0x8] sm:$0xff]
  %v23 = vld [vmem:[%s3] sm:$0x3f]
  %s24 = scalar_lea.vmem %s2, 768
  %v25 = vld [vmem:[%s24] sm:$0xff]
  %v26 = vld [vmem:[%s24 + $0x8] sm:$0xff]
  %v27 = vld [vmem:[%s24 + $0x10] sm:$0xff]
  %v28 = vld [vmem:[%s24 + $0x18] sm:$0xff]
  %v29 = vld [vmem:[%s24 + $0x20] sm:$0xff]
  %v30 = vld [vmem:[%s24 + $0x28] sm:$0xff]
  %v31 = vld [vmem:[%s24 + $0x30] sm:$0xff]
  %v32 = vld [vmem:[%s24 + $0x38] sm:$0xff]
  %v33 = vld [vmem:[%s24 + $0x40] sm:$0xff]
  %v34 = vld [vmem:[%s24 + $0x48] sm:$0xff]
  %v35 = vld [vmem:[%s24 + $0x50] sm:$0xff]
  %v36 = vld [vmem:[%s24 + $0x58] sm:$0xff]
  %v37 = vld [vmem:[%s24 + $0x60] sm:$0xff]
  %v38 = vld [vmem:[%s24 + $0x68] sm:$0xff]
  %v39 = vld [vmem:[%s24 + $0x70] sm:$0xff]
  %v40 = vld [vmem:[%s24 + $0x78] sm:$0xff]
  %s41 = sld [smem:[#allocation2]]
  %s42 = scalar_lea.vmem %s2, 128
  %v43 = vld [vmem:[%s42] sm:$0xff]
  %v44 = vld [vmem:[%s42 + $0x8] sm:$0xff]
  %v45 = vld [vmem:[%s42 + $0x10] sm:$0xff]
  %v46 = vld [vmem:[%s42 + $0x18] sm:$0xff]
  %v47 = vld [vmem:[%s42 + $0x20] sm:$0xff]
  %v48 = vld [vmem:[%s42 + $0x28] sm:$0xff]
  %v49 = vld [vmem:[%s42 + $0x30] sm:$0xff]
  %v50 = vld [vmem:[%s42 + $0x38] sm:$0xff]
  %v51 = vld [vmem:[%s42 + $0x40] sm:$0xff]
  %v52 = vld [vmem:[%s42 + $0x48] sm:$0xff]
  %v53 = vld [vmem:[%s42 + $0x50] sm:$0xff]
  %v54 = vld [vmem:[%s42 + $0x58] sm:$0xff]
  %v55 = vld [vmem:[%s42 + $0x60] sm:$0xff]
  %v56 = vld [vmem:[%s42 + $0x68] sm:$0xff]
  %v57 = vld [vmem:[%s42 + $0x70] sm:$0xff]
  %v58 = vld [vmem:[%s42 + $0x78] sm:$0xff]
  %59 = vmatpush.msra.mxu0 %v58
  %60 = vmatpush.msra.mxu0 %v57
  %61 = vmatpush.msra.mxu0 %v56
  %62 = vmatpush.msra.mxu0 %v55
  %63 = vmatpush.msra.mxu0 %v54
  %64 = vmatpush.msra.mxu0 %v53
  %65 = vmatpush.msra.mxu0 %v52
  %66 = vmatpush.msra.mxu0 %v51
  %67 = vmatpush.msra.mxu0 %v50
  %68 = vmatpush.msra.mxu0 %v49
  %69 = vmatpush.msra.mxu0 %v48
  %70 = vmatpush.msra.mxu0 %v47
  %71 = vmatpush.msra.mxu0 %v46
  %72 = vmatpush.msra.mxu0 %v45
  %73 = vmatpush.msra.mxu0 %v44
  %74 = vmatpush.msra.mxu0 %v43
  %75 = vmatmul.f32.gmra.mxu0 %v21
  %v76 = vpop.f32.mrf.mxu0
  %v77 = vadd.f32 0.0, %v76
  %78 = vmatmul.f32.gmra.mxu0 %v22
  %v79 = vpop.f32.mrf.mxu0
  %v80 = vadd.f32 0.0, %v79
  %81 = vdwg.mxu0
  %v82 = vperm.slane %v23, 0
  %v83 = vadd.f32 %v82, %v77
  %v84 = vadd.f32 %v82, %v80
  %v85 = vld [vmem:[%s1] sm:$0xff]
  %v86 = vld [vmem:[%s1 + $0x8] sm:$0xff]
  %vm87 = vcmask 130048
  %v89 = vsel %vm87, %v85, 0
  %v92 = vsel %vm87, %v86, 0
  %94 = vmatpush.msra.mxu0 0.0
  %95 = vmatpush.msra.mxu0 0.0
  %96 = vmatpush.msra.mxu0 0.0
  %97 = vmatpush.msra.mxu0 0.0
  %98 = vmatpush.msra.mxu0 0.0
  %99 = vmatpush.msra.mxu0 0.0
  %100 = vmatpush.msra.mxu0 0.0
  %101 = vmatpush.msra.mxu0 0.0
  %102 = vmatpush.msra.mxu0 0.0
  %103 = vmatpush.msra.mxu0 0.0
  %104 = vmatpush.msra.mxu0 0.0
  %105 = vmatpush.msra.mxu0 0.0
  %106 = vmatpush.msra.mxu0 0.0
  %107 = vmatpush.msra.mxu0 0.0
  %108 = vmatpush.msra.mxu0 %v22
  %109 = vmatpush.msra.mxu0 %v21
  %110 = vmatmul.f32.gmra.mxu0 %v89
  %v111 = vpop.f32.mrf.mxu0
  %v112 = vadd.f32 0.0, %v111
  %113 = vmatmul.f32.gmra.mxu0 %v92
  %v114 = vpop.f32.mrf.mxu0
  %v115 = vadd.f32 0.0, %v114
  %116 = vdwg.mxu0
  %v117 = vld [vmem:[%s2] sm:$0xff]
  %v118 = vld [vmem:[%s2 + $0x8] sm:$0xff]
  %v119 = vld [vmem:[%s2 + $0x10] sm:$0xff]
  %v120 = vld [vmem:[%s2 + $0x18] sm:$0xff]
  %v121 = vld [vmem:[%s2 + $0x20] sm:$0xff]
  %v122 = vld [vmem:[%s2 + $0x28] sm:$0xff]
  %v123 = vld [vmem:[%s2 + $0x30] sm:$0xff]
  %v124 = vld [vmem:[%s2 + $0x38] sm:$0xff]
  %v125 = vld [vmem:[%s2 + $0x40] sm:$0xff]
  %v126 = vld [vmem:[%s2 + $0x48] sm:$0xff]
  %v127 = vld [vmem:[%s2 + $0x50] sm:$0xff]
  %v128 = vld [vmem:[%s2 + $0x58] sm:$0xff]
  %v129 = vld [vmem:[%s2 + $0x60] sm:$0xff]
  %v130 = vld [vmem:[%s2 + $0x68] sm:$0xff]
  %v131 = vld [vmem:[%s2 + $0x70] sm:$0xff]
  %v132 = vld [vmem:[%s2 + $0x78] sm:$0xff]
  %133 = vmatpush.msra.mxu0 %v132
  %134 = vmatpush.msra.mxu0 %v131
  %135 = vmatpush.msra.mxu0 %v130
  %136 = vmatpush.msra.mxu0 %v129
  %137 = vmatpush.msra.mxu0 %v128
  %138 = vmatpush.msra.mxu0 %v127
  %139 = vmatpush.msra.mxu0 %v126
  %140 = vmatpush.msra.mxu0 %v125
  %141 = vmatpush.msra.mxu0 %v124
  %142 = vmatpush.msra.mxu0 %v123
  %143 = vmatpush.msra.mxu0 %v122
  %144 = vmatpush.msra.mxu0 %v121
  %145 = vmatpush.msra.mxu0 %v120
  %146 = vmatpush.msra.mxu0 %v119
  %147 = vmatpush.msra.mxu0 %v118
  %148 = vmatpush.msra.mxu0 %v117
  %149 = vmatmul.f32.gmra.mxu0 %v112
  %v150 = vpop.f32.mrf.mxu0
  %v151 = vadd.f32 0.0, %v150
  %152 = vmatmul.f32.gmra.mxu0 %v115
  %v153 = vpop.f32.mrf.mxu0
  %v154 = vadd.f32 0.0, %v153
  %155 = vdwg.mxu0
  %v156 = vadd.f32 %v83, %v151
  %v157 = vadd.f32 %v84, %v154
  %s158 = scalar_lea.vmem %s1, 16
  %v159 = vld [vmem:[%s158] sm:$0xff]
  %v160 = vld [vmem:[%s158 + $0x8] sm:$0xff]
  %v162 = vsel %vm87, %v159, 0
  %v165 = vsel %vm87, %v160, 0
  %167 = vmatpush.msra.mxu0 0.0
  %168 = vmatpush.msra.mxu0 0.0
  %169 = vmatpush.msra.mxu0 0.0
  %170 = vmatpush.msra.mxu0 0.0
  %171 = vmatpush.msra.mxu0 0.0
  %172 = vmatpush.msra.mxu0 0.0
  %173 = vmatpush.msra.mxu0 0.0
  %174 = vmatpush.msra.mxu0 0.0
  %175 = vmatpush.msra.mxu0 0.0
  %176 = vmatpush.msra.mxu0 0.0
  %177 = vmatpush.msra.mxu0 0.0
  %178 = vmatpush.msra.mxu0 0.0
  %179 = vmatpush.msra.mxu0 0.0
  %180 = vmatpush.msra.mxu0 0.0
  %181 = vmatpush.msra.mxu0 %v22
  %182 = vmatpush.msra.mxu0 %v21
  %183 = vmatmul.f32.gmra.mxu0 %v162
  %v184 = vpop.f32.mrf.mxu0
  %v185 = vadd.f32 0.0, %v184
  %186 = vmatmul.f32.gmra.mxu0 %v165
  %v187 = vpop.f32.mrf.mxu0
  %v188 = vadd.f32 0.0, %v187
  %189 = vdwg.mxu0
  %s190 = scalar_lea.vmem %s2, 256
  %v191 = vld [vmem:[%s190] sm:$0xff]
  %v192 = vld [vmem:[%s190 + $0x8] sm:$0xff]
  %v193 = vld [vmem:[%s190 + $0x10] sm:$0xff]
  %v194 = vld [vmem:[%s190 + $0x18] sm:$0xff]
  %v195 = vld [vmem:[%s190 + $0x20] sm:$0xff]
  %v196 = vld [vmem:[%s190 + $0x28] sm:$0xff]
  %v197 = vld [vmem:[%s190 + $0x30] sm:$0xff]
  %v198 = vld [vmem:[%s190 + $0x38] sm:$0xff]
  %v199 = vld [vmem:[%s190 + $0x40] sm:$0xff]
  %v200 = vld [vmem:[%s190 + $0x48] sm:$0xff]
  %v201 = vld [vmem:[%s190 + $0x50] sm:$0xff]
  %v202 = vld [vmem:[%s190 + $0x58] sm:$0xff]
  %v203 = vld [vmem:[%s190 + $0x60] sm:$0xff]
  %v204 = vld [vmem:[%s190 + $0x68] sm:$0xff]
  %v205 = vld [vmem:[%s190 + $0x70] sm:$0xff]
  %v206 = vld [vmem:[%s190 + $0x78] sm:$0xff]
  %207 = vmatpush.msra.mxu0 %v206
  %208 = vmatpush.msra.mxu0 %v205
  %209 = vmatpush.msra.mxu0 %v204
  %210 = vmatpush.msra.mxu0 %v203
  %211 = vmatpush.msra.mxu0 %v202
  %212 = vmatpush.msra.mxu0 %v201
  %213 = vmatpush.msra.mxu0 %v200
  %214 = vmatpush.msra.mxu0 %v199
  %215 = vmatpush.msra.mxu0 %v198
  %216 = vmatpush.msra.mxu0 %v197
  %217 = vmatpush.msra.mxu0 %v196
  %218 = vmatpush.msra.mxu0 %v195
  %219 = vmatpush.msra.mxu0 %v194
  %220 = vmatpush.msra.mxu0 %v193
  %221 = vmatpush.msra.mxu0 %v192
  %222 = vmatpush.msra.mxu0 %v191
  %223 = vmatmul.f32.gmra.mxu0 %v185
  %v224 = vpop.f32.mrf.mxu0
  %v225 = vadd.f32 0.0, %v224
  %226 = vmatmul.f32.gmra.mxu0 %v188
  %v227 = vpop.f32.mrf.mxu0
  %v228 = vadd.f32 0.0, %v227
  %229 = vdwg.mxu0
  %v230 = vadd.f32 %v156, %v225
  %v231 = vadd.f32 %v157, %v228
  %v232 = vadd.f32 %v230, %v231
  %v233 = vrot.slane %v232, 4
  %v234 = vadd.f32 %v232, %v233
  %v235 = vrot.slane %v234, 2
  %v236 = vadd.f32 %v234, %v235
  %v237 = vrot.slane %v236, 1
  %v238 = vadd.f32 %v236, %v237
  %v239 = vmul.f32 %v230, %v230
  %v240 = vmul.f32 %v231, %v231
  %v241 = vadd.f32 %v239, %v240
  %v242 = vrot.slane %v241, 4
  %v243 = vadd.f32 %v241, %v242
  %v244 = vrot.slane %v243, 2
  %v245 = vadd.f32 %v243, %v244
  %v246 = vrot.slane %v245, 1
  %v247 = vadd.f32 %v245, %v246
  %vm248 = vcmask 1040384
  %v249 = vsel %vm248, %v238, %v247
  %250 = vmatpush.msra.mxu0 %v40
  %251 = vmatpush.msra.mxu0 %v39
  %252 = vmatpush.msra.mxu0 %v38
  %253 = vmatpush.msra.mxu0 %v37
  %254 = vmatpush.msra.mxu0 %v36
  %255 = vmatpush.msra.mxu0 %v35
  %256 = vmatpush.msra.mxu0 %v34
  %257 = vmatpush.msra.mxu0 %v33
  %258 = vmatpush.msra.mxu0 %v32
  %259 = vmatpush.msra.mxu0 %v31
  %260 = vmatpush.msra.mxu0 %v30
  %261 = vmatpush.msra.mxu0 %v29
  %262 = vmatpush.msra.mxu0 %v28
  %263 = vmatpush.msra.mxu0 %v27
  %264 = vmatpush.msra.mxu0 %v26
  %265 = vmatpush.msra.mxu0 %v25
  %266 = vmatmul.f32.gmra.mxu0 %v249
  %v267 = vpop.f32.mrf.mxu0
  %v268 = vadd.f32 0.0, %v267
  %269 = vdwg.mxu0
  %v270 = vmul.f32 %v268, %v268
  %v272 = vrot.slane %v270, 7
  %v274 = vsub.f32 %v268, %v272
  %v275 = vadd.f32 %v274, 1e-05
  %v276 = vrsqrt.pop %v275
  %v277 = vmul.f32 %v276, %v275
  %v278 = vmul.f32 %v277, %v276
  %v279 = vmul.f32 0.5, %v278
  %v280 = vsub.f32 1.5, %v279
  %v281 = vmul.f32 %v276, %v280
  %vm282 = vweird.f32 %v275
  %vm283 = vweird.f32 %v276
  %vm284 = vmor %vm282, %vm283
  %v285 = vsel %vm284, %v276, %v281
  %v286 = vmul.f32 %v23, %v285
  %v288 = vrot.slane %v286, 1
  %v290 = vmul.f32 %v268, %v288
  %v292 = vrot.slane %v290, 6
  %v294 = vsub.f32 %v23, %v292
  %v295 = vperm.slane %v286, 1
  %v296 = vmul.f32 %v230, %v295
  %v297 = vmul.f32 %v231, %v295
  %v298 = vperm.slane %v294, 2
  %v299 = vadd.f32 %v296, %v298
  %v300 = vadd.f32 %v297, %v298
  %vm301 = vcmp.gt.f32.partialorder %v299, 0.0
  %vm302 = vcmp.gt.f32.partialorder %v300, 0.0
  %v303 = vstv %s41
  %v304 = vmul.f32 %v303, %v299
  %v305 = vmul.f32 %v303, %v300
  %v306 = vsel %vm301, %v299, %v304
  %v307 = vsel %vm302, %v300, %v305
  %s308 = scalar_lea.vmem %s2, 512
  %v309 = vld [vmem:[%s308] sm:$0xff]
  %v310 = vld [vmem:[%s308 + $0x8] sm:$0xff]
  %v311 = vld [vmem:[%s308 + $0x10] sm:$0xff]
  %v312 = vld [vmem:[%s308 + $0x18] sm:$0xff]
  %v313 = vld [vmem:[%s308 + $0x20] sm:$0xff]
  %v314 = vld [vmem:[%s308 + $0x28] sm:$0xff]
  %v315 = vld [vmem:[%s308 + $0x30] sm:$0xff]
  %v316 = vld [vmem:[%s308 + $0x38] sm:$0xff]
  %v317 = vld [vmem:[%s308 + $0x40] sm:$0xff]
  %v318 = vld [vmem:[%s308 + $0x48] sm:$0xff]
  %v319 = vld [vmem:[%s308 + $0x50] sm:$0xff]
  %v320 = vld [vmem:[%s308 + $0x58] sm:$0xff]
  %v321 = vld [vmem:[%s308 + $0x60] sm:$0xff]
  %v322 = vld [vmem:[%s308 + $0x68] sm:$0xff]
  %v323 = vld [vmem:[%s308 + $0x70] sm:$0xff]
  %v324 = vld [vmem:[%s308 + $0x78] sm:$0xff]
  %325 = vmatpush.msra.mxu0 %v324
  %326 = vmatpush.msra.mxu0 %v323
  %327 = vmatpush.msra.mxu0 %v322
  %328 = vmatpush.msra.mxu0 %v321
  %329 = vmatpush.msra.mxu0 %v320
  %330 = vmatpush.msra.mxu0 %v319
  %331 = vmatpush.msra.mxu0 %v318
  %332 = vmatpush.msra.mxu0 %v317
  %333 = vmatpush.msra.mxu0 %v316
  %334 = vmatpush.msra.mxu0 %v315
  %335 = vmatpush.msra.mxu0 %v314
  %336 = vmatpush.msra.mxu0 %v313
  %337 = vmatpush.msra.mxu0 %v312
  %338 = vmatpush.msra.mxu0 %v311
  %339 = vmatpush.msra.mxu0 %v310
  %340 = vmatpush.msra.mxu0 %v309
  %341 = vmatmul.f32.gmra.mxu0 %v306
  %v342 = vpop.f32.mrf.mxu0
  %v343 = vadd.f32 0.0, %v342
  %344 = vmatmul.f32.gmra.mxu0 %v307
  %v345 = vpop.f32.mrf.mxu0
  %v346 = vadd.f32 0.0, %v345
  %347 = vdwg.mxu0
  %v348 = vperm.slane %v23, 3
  %v349 = vadd.f32 %v348, %v343
  %v350 = vadd.f32 %v348, %v346
  %351 = vmatpush.msra.mxu0 0.0
  %352 = vmatpush.msra.mxu0 0.0
  %353 = vmatpush.msra.mxu0 0.0
  %354 = vmatpush.msra.mxu0 0.0
  %355 = vmatpush.msra.mxu0 0.0
  %356 = vmatpush.msra.mxu0 0.0
  %357 = vmatpush.msra.mxu0 0.0
  %358 = vmatpush.msra.mxu0 0.0
  %359 = vmatpush.msra.mxu0 0.0
  %360 = vmatpush.msra.mxu0 0.0
  %361 = vmatpush.msra.mxu0 0.0
  %362 = vmatpush.msra.mxu0 0.0
  %363 = vmatpush.msra.mxu0 0.0
  %364 = vmatpush.msra.mxu0 0.0
  %365 = vmatpush.msra.mxu0 %v307
  %366 = vmatpush.msra.mxu0 %v306
  %367 = vmatmul.f32.gmra.mxu0 %v89
  %v368 = vpop.f32.mrf.mxu0
  %v369 = vadd.f32 0.0, %v368
  %370 = vmatmul.f32.gmra.mxu0 %v92
  %v371 = vpop.f32.mrf.mxu0
  %v372 = vadd.f32 0.0, %v371
  %373 = vdwg.mxu0
  %s374 = scalar_lea.vmem %s2, 384
  %v375 = vld [vmem:[%s374] sm:$0xff]
  %v376 = vld [vmem:[%s374 + $0x8] sm:$0xff]
  %v377 = vld [vmem:[%s374 + $0x10] sm:$0xff]
  %v378 = vld [vmem:[%s374 + $0x18] sm:$0xff]
  %v379 = vld [vmem:[%s374 + $0x20] sm:$0xff]
  %v380 = vld [vmem:[%s374 + $0x28] sm:$0xff]
  %v381 = vld [vmem:[%s374 + $0x30] sm:$0xff]
  %v382 = vld [vmem:[%s374 + $0x38] sm:$0xff]
  %v383 = vld [vmem:[%s374 + $0x40] sm:$0xff]
  %v384 = vld [vmem:[%s374 + $0x48] sm:$0xff]
  %v385 = vld [vmem:[%s374 + $0x50] sm:$0xff]
  %v386 = vld [vmem:[%s374 + $0x58] sm:$0xff]
  %v387 = vld [vmem:[%s374 + $0x60] sm:$0xff]
  %v388 = vld [vmem:[%s374 + $0x68] sm:$0xff]
  %v389 = vld [vmem:[%s374 + $0x70] sm:$0xff]
  %v390 = vld [vmem:[%s374 + $0x78] sm:$0xff]
  %391 = vmatpush.msra.mxu0 %v390
  %392 = vmatpush.msra.mxu0 %v389
  %393 = vmatpush.msra.mxu0 %v388
  %394 = vmatpush.msra.mxu0 %v387
  %395 = vmatpush.msra.mxu0 %v386
  %396 = vmatpush.msra.mxu0 %v385
  %397 = vmatpush.msra.mxu0 %v384
  %398 = vmatpush.msra.mxu0 %v383
  %399 = vmatpush.msra.mxu0 %v382
  %400 = vmatpush.msra.mxu0 %v381
  %401 = vmatpush.msra.mxu0 %v380
  %402 = vmatpush.msra.mxu0 %v379
  %403 = vmatpush.msra.mxu0 %v378
  %404 = vmatpush.msra.mxu0 %v377
  %405 = vmatpush.msra.mxu0 %v376
  %406 = vmatpush.msra.mxu0 %v375
  %407 = vmatmul.f32.gmra.mxu0 %v369
  %v408 = vpop.f32.mrf.mxu0
  %v409 = vadd.f32 0.0, %v408
  %410 = vmatmul.f32.gmra.mxu0 %v372
  %v411 = vpop.f32.mrf.mxu0
  %v412 = vadd.f32 0.0, %v411
  %413 = vdwg.mxu0
  %v414 = vadd.f32 %v349, %v409
  %v415 = vadd.f32 %v350, %v412
  %416 = vmatpush.msra.mxu0 0.0
  %417 = vmatpush.msra.mxu0 0.0
  %418 = vmatpush.msra.mxu0 0.0
  %419 = vmatpush.msra.mxu0 0.0
  %420 = vmatpush.msra.mxu0 0.0
  %421 = vmatpush.msra.mxu0 0.0
  %422 = vmatpush.msra.mxu0 0.0
  %423 = vmatpush.msra.mxu0 0.0
  %424 = vmatpush.msra.mxu0 0.0
  %425 = vmatpush.msra.mxu0 0.0
  %426 = vmatpush.msra.mxu0 0.0
  %427 = vmatpush.msra.mxu0 0.0
  %428 = vmatpush.msra.mxu0 0.0
  %429 = vmatpush.msra.mxu0 0.0
  %430 = vmatpush.msra.mxu0 %v307
  %431 = vmatpush.msra.mxu0 %v306
  %432 = vmatmul.f32.gmra.mxu0 %v162
  %v433 = vpop.f32.mrf.mxu0
  %v434 = vadd.f32 0.0, %v433
  %435 = vmatmul.f32.gmra.mxu0 %v165
  %v436 = vpop.f32.mrf.mxu0
  %v437 = vadd.f32 0.0, %v436
  %438 = vdwg.mxu0
  %s439 = scalar_lea.vmem %s2, 640
  %v440 = vld [vmem:[%s439] sm:$0xff]
  %v441 = vld [vmem:[%s439 + $0x8] sm:$0xff]
  %v442 = vld [vmem:[%s439 + $0x10] sm:$0xff]
  %v443 = vld [vmem:[%s439 + $0x18] sm:$0xff]
  %v444 = vld [vmem:[%s439 + $0x20] sm:$0xff]
  %v445 = vld [vmem:[%s439 + $0x28] sm:$0xff]
  %v446 = vld [vmem:[%s439 + $0x30] sm:$0xff]
  %v447 = vld [vmem:[%s439 + $0x38] sm:$0xff]
  %v448 = vld [vmem:[%s439 + $0x40] sm:$0xff]
  %v449 = vld [vmem:[%s439 + $0x48] sm:$0xff]
  %v450 = vld [vmem:[%s439 + $0x50] sm:$0xff]
  %v451 = vld [vmem:[%s439 + $0x58] sm:$0xff]
  %v452 = vld [vmem:[%s439 + $0x60] sm:$0xff]
  %v453 = vld [vmem:[%s439 + $0x68] sm:$0xff]
  %v454 = vld [vmem:[%s439 + $0x70] sm:$0xff]
  %v455 = vld [vmem:[%s439 + $0x78] sm:$0xff]
  %456 = vmatpush.msra.mxu0 %v455
  %457 = vmatpush.msra.mxu0 %v454
  %458 = vmatpush.msra.mxu0 %v453
  %459 = vmatpush.msra.mxu0 %v452
  %460 = vmatpush.msra.mxu0 %v451
  %461 = vmatpush.msra.mxu0 %v450
  %462 = vmatpush.msra.mxu0 %v449
  %463 = vmatpush.msra.mxu0 %v448
  %464 = vmatpush.msra.mxu0 %v447
  %465 = vmatpush.msra.mxu0 %v446
  %466 = vmatpush.msra.mxu0 %v445
  %467 = vmatpush.msra.mxu0 %v444
  %468 = vmatpush.msra.mxu0 %v443
  %469 = vmatpush.msra.mxu0 %v442
  %470 = vmatpush.msra.mxu0 %v441
  %471 = vmatpush.msra.mxu0 %v440
  %472 = vmatmul.f32.gmra.mxu0 %v434
  %v473 = vpop.f32.mrf.mxu0
  %v474 = vadd.f32 0.0, %v473
  %475 = vmatmul.f32.gmra.mxu0 %v437
  %v476 = vpop.f32.mrf.mxu0
  %v477 = vadd.f32 0.0, %v476
  %478 = vdwg.mxu0
  %v479 = vadd.f32 %v414, %v474
  %v480 = vadd.f32 %v415, %v477
  %v481 = vadd.f32 %v479, %v480
  %v482 = vrot.slane %v481, 4
  %v483 = vadd.f32 %v481, %v482
  %v484 = vrot.slane %v483, 2
  %v485 = vadd.f32 %v483, %v484
  %v486 = vrot.slane %v485, 1
  %v487 = vadd.f32 %v485, %v486
  %v488 = vmul.f32 %v479, %v479
  %v489 = vmul.f32 %v480, %v480
  %v490 = vadd.f32 %v488, %v489
  %v491 = vrot.slane %v490, 4
  %v492 = vadd.f32 %v490, %v491
  %v493 = vrot.slane %v492, 2
  %v494 = vadd.f32 %v492, %v493
  %v495 = vrot.slane %v494, 1
  %v496 = vadd.f32 %v494, %v495
  %v497 = vsel %vm248, %v487, %v496
  %498 = vmatpush.msra.mxu0 %v40
  %499 = vmatpush.msra.mxu0 %v39
  %500 = vmatpush.msra.mxu0 %v38
  %501 = vmatpush.msra.mxu0 %v37
  %502 = vmatpush.msra.mxu0 %v36
  %503 = vmatpush.msra.mxu0 %v35
  %504 = vmatpush.msra.mxu0 %v34
  %505 = vmatpush.msra.mxu0 %v33
  %506 = vmatpush.msra.mxu0 %v32
  %507 = vmatpush.msra.mxu0 %v31
  %508 = vmatpush.msra.mxu0 %v30
  %509 = vmatpush.msra.mxu0 %v29
  %510 = vmatpush.msra.mxu0 %v28
  %511 = vmatpush.msra.mxu0 %v27
  %512 = vmatpush.msra.mxu0 %v26
  %513 = vmatpush.msra.mxu0 %v25
  %514 = vmatmul.f32.gmra.mxu0 %v497
  %v515 = vpop.f32.mrf.mxu0
  %v516 = vadd.f32 0.0, %v515
  %517 = vdwg.mxu0
  %v518 = vmul.f32 %v516, %v516
  %v520 = vrot.slane %v518, 7
  %v522 = vsub.f32 %v516, %v520
  %v523 = vadd.f32 %v522, 1e-05
  %v524 = vrsqrt.pop %v523
  %v525 = vmul.f32 %v524, %v523
  %v526 = vmul.f32 %v525, %v524
  %v527 = vmul.f32 0.5, %v526
  %v528 = vsub.f32 1.5, %v527
  %v529 = vmul.f32 %v524, %v528
  %vm530 = vweird.f32 %v523
  %vm531 = vweird.f32 %v524
  %vm532 = vmor %vm530, %vm531
  %v533 = vsel %vm532, %v524, %v529
  %v535 = vrot.slane %v533, 5
  %v537 = vmul.f32 %v23, %v535
  %v539 = vrot.slane %v537, 4
  %v541 = vmul.f32 %v516, %v539
  %v543 = vrot.slane %v541, 3
  %v545 = vsub.f32 %v23, %v543
  %v546 = vperm.slane %v537, 4
  %v547 = vmul.f32 %v479, %v546
  %v548 = vmul.f32 %v480, %v546
  %v549 = vperm.slane %v545, 5
  %v550 = vadd.f32 %v547, %v549
  %v551 = vadd.f32 %v548, %v549
  %v552 = vadd.f32 %v550, %v21
  %v553 = vadd.f32 %v551, %v22
  %554 = vst [vmem:[%s5] sm:$0xff] %v552
  %555 = vst [vmem:[%s5 + $0x8] sm:$0xff] %v553
  // Predicated region
  $region22: #{residual_block.1} parent=0 // pred_check
    _
  $region23: #{residual_block.1} parent=0 // pred_check_branch
    %557 = sbr.rel (0) target = $region25
  $region24: #{residual_block.1} parent=0 // pred_region
    _
  $region25: #{residual_block.1} parent=0 // pred_fallthru
    _
  // Predicated region
  $region26: #{residual_block.1} parent=0 // pred_check
    _
  $region27: #{residual_block.1} parent=0 // pred_check_branch
    %559 = sbr.rel (0) target = $region29
  $region28: #{residual_block.1} parent=0 // pred_region
    _
  $region29: #{residual_block.1} parent=0 // pred_fallthru
    _

</llo_original>
